<compile_context>
chip_gen: v7x
topology: tpu7x:2x2x1
jax: 0.10.0
libtpu: 0.0.40
codegen_flags: <defaults>
</compile_context>

<pallas_src>
import jax
import jax.numpy as jnp
from jax.experimental import pallas as pl
from jax.experimental.pallas import tpu as pltpu

IN_FEATURES = 784
HIDDEN = 100
NUM_LABELS = 10

H_PAD = 128            # 100 -> 128 hidden width (lane-exact)
N_PAD = 128            # 10  -> 128 lane-dense output block
MAX_BATCH_TILE = 1024  # rows per grid step (multiple of 8)


def _round_up(x, m):
    return ((x + m - 1) // m) * m


def fnn_kernel(x_ref, w1t_ref, w3t_ref, out_ref):
    # x_ref:   (TB, 784)      f32  -- streamed batch tile (partial tail block OK)
    # w1t_ref: (784, H_PAD)   bf16 -- resident across the whole grid
    # w3t_ref: (H_PAD, N_PAD) bf16 -- resident across the whole grid
    # out_ref: (TB, N_PAD)    bf16 -- lane-dense padded output
    x_bf = x_ref[...].astype(jnp.bfloat16)              # free VPU cast under DMA bottleneck
    h1 = jnp.dot(x_bf, w1t_ref[...],
                 preferred_element_type=jnp.float32)    # (TB, H_PAD) f32
    h1 = jnp.maximum(h1, 0.0)                           # ReLU on f32 acc; Dropout(p=0.0) is identity
    out = jnp.dot(h1.astype(jnp.bfloat16), w3t_ref[...],
                  preferred_element_type=jnp.float32)   # (TB, N_PAD) f32
    out_ref[...] = out.astype(out_ref.dtype)            # bf16 writeback (half the bytes)
    # NOTE: hidden_layer2 (W2) is dead code in the PyTorch forward -- its result never
    # feeds the returned output, so it is intentionally not computed here.


def prepare_params(w1, w3):
    """One-time (hoisted) param prep: transpose -> zero-pad cols/rows 100..127 -> bf16.

    w1: (100, 784) f32, w3: (10, 100) f32
    Returns w1t_p: (784, 128) bf16, w3t_p: (128, 128) bf16.
    Zero padding + ReLU(0)=0 guarantees padded hidden lanes contribute nothing.
    """
    w1t = jnp.zeros((IN_FEATURES, H_PAD), jnp.float32).at[:, :HIDDEN].set(w1.T)
    w3t = jnp.zeros((H_PAD, N_PAD), jnp.float32).at[:HIDDEN, :NUM_LABELS].set(w3.T)
    return w1t.astype(jnp.bfloat16), w3t.astype(jnp.bfloat16)


@jax.jit
def small_fnn_forward(x_nchw, w1t_p, w3t_p):
    """x_nchw: (B, 1, 28, 28) f32; w1t_p/w3t_p from prepare_params(). Returns (B, 10) f32."""
    B = x_nchw.shape[0]
    x2d = x_nchw.reshape(B, IN_FEATURES)   # zero-copy reshape, stays f32 in HBM

    # Batch tile: ~ceil(B/2) so batches bigger than one tile give >= 2 grid steps
    # (v7x megacore), rounded up to a sublane multiple of 8, capped at MAX_BATCH_TILE.
    tb = min(MAX_BATCH_TILE, _round_up(max(pl.cdiv(B, 2), 1), 8))
    num_blocks = pl.cdiv(B, tb)            # partial last block: OOB rows are discarded below
    b_ceil = num_blocks * tb               # output padded to full blocks (always full writes)

    flops = 2 * b_ceil * (IN_FEATURES * H_PAD + H_PAD * N_PAD)
    bytes_accessed = (B * IN_FEATURES * 4                        # x f32 read
                      + IN_FEATURES * H_PAD * 2 + H_PAD * N_PAD * 2   # resident weights
                      + b_ceil * N_PAD * 2)                      # bf16 output writeback

    out_pad = pl.pallas_call(
        fnn_kernel,
        out_shape=jax.ShapeDtypeStruct((b_ceil, N_PAD), jnp.bfloat16),
        grid_spec=pltpu.PrefetchScalarGridSpec(
            num_scalar_prefetch=0,
            grid=(num_blocks,),
            in_specs=[
                pl.BlockSpec((tb, IN_FEATURES), lambda i: (i, 0)),  # x: streamed f32 tiles
                pl.BlockSpec((IN_FEATURES, H_PAD), lambda i: (0, 0)),  # W1T: resident
                pl.BlockSpec((H_PAD, N_PAD), lambda i: (0, 0)),        # W3T: resident
            ],
            out_specs=pl.BlockSpec((tb, N_PAD), lambda i: (i, 0)),
        ),
        compiler_params=pltpu.CompilerParams(
            dimension_semantics=("parallel",),   # shard batch tiles across TCs (v7x)
        ),
        cost_estimate=pl.CostEstimate(flops=flops, transcendentals=0,
                                      bytes_accessed=bytes_accessed),
    )(x2d, w1t_p, w3t_p)

    # Padded garbage rows (partial last block) and padded lanes 10..127 are sliced off.
    return out_pad[:B, :NUM_LABELS].astype(jnp.float32)


def init_params(key):
    """Deterministic synthetic init matching nn.Linear shapes (no bias)."""
    k1, k2, k3 = jax.random.split(key, 3)
    # torch default init: U(-1/sqrt(fan_in), 1/sqrt(fan_in))
    b1 = 1.0 / jnp.sqrt(IN_FEATURES)
    b2 = 1.0 / jnp.sqrt(HIDDEN)
    w1 = jax.random.uniform(k1, (HIDDEN, IN_FEATURES), jnp.float32, -b1, b1)
    w2 = jax.random.uniform(k2, (HIDDEN, HIDDEN), jnp.float32, -b2, b2)  # unused by forward
    w3 = jax.random.uniform(k3, (NUM_LABELS, HIDDEN), jnp.float32, -b2, b2)
    return w1, w2, w3


if __name__ == "__main__":
    key = jax.random.PRNGKey(0)
    kx, kp = jax.random.split(key)
    B = 2
    x = jax.random.normal(kx, (B, 1, 28, 28), jnp.float32)   # NCHW input
    w1, w2, w3 = init_params(kp)

    # One-time (hoisted) weight prep, then the hot forward call.
    w1t_p, w3t_p = prepare_params(w1, w3)
    out = small_fnn_forward(x, w1t_p, w3t_p)
    out = jax.block_until_ready(out)
    assert out.shape == (B, NUM_LABELS)

    # Reference 1: mirror the kernel math path (bf16 weights / bf16 h1 / bf16 output,
    # f32 accumulation) -- tight tolerance.
    x2d = x.reshape(B, -1)
    w1_bf = w1.astype(jnp.bfloat16).astype(jnp.float32)
    w3_bf = w3.astype(jnp.bfloat16).astype(jnp.float32)
    x_bf = x2d.astype(jnp.bfloat16).astype(jnp.float32)
    h1_bf = jnp.maximum(x_bf @ w1_bf.T, 0.0)
    ref_bf = (h1_bf.astype(jnp.bfloat16).astype(jnp.float32) @ w3_bf.T)
    ref_bf = ref_bf.astype(jnp.bfloat16).astype(jnp.float32)
    assert jnp.allclose(out, ref_bf, atol=5e-3, rtol=5e-3)

    # Reference 2: pure-f32 (PyTorch-equivalent) forward, loose tol for bf16 casts.
    h1_f = jnp.maximum(x2d @ w1.T, 0.0)
    ref_f = h1_f @ w3.T
    assert jnp.allclose(out, ref_f, atol=5e-2, rtol=5e-2)

    print("KERNEL_OK")
</pallas_src>

<mosaic_0001>
module attributes {stable_mosaic.version = 11 : i64} {
  func.func @fnn_kernel(%arg0: i32, %arg1: memref<8x784xf32, #tpu.memory_space<vmem>>, %arg2: memref<784x128xbf16, #tpu.memory_space<vmem>>, %arg3: memref<128x128xbf16, #tpu.memory_space<vmem>>, %arg4: memref<8x128xbf16, #tpu.memory_space<vmem>>) attributes {dimension_semantics = [#tpu.dimension_semantics<parallel>], iteration_bounds = array<i64: 1>, scalar_prefetch = 0 : i64, scratch_operands = 0 : i64, tpu.core_type = #tpu.core_type<tc>, window_params = [{transform_indices = @transform_0, window_bounds = array<i64: 8, 784>}, {pipeline_mode = #tpu.pipeline_mode<synchronous>, transform_indices = @transform_1, window_bounds = array<i64: 784, 128>}, {pipeline_mode = #tpu.pipeline_mode<synchronous>, transform_indices = @transform_2, window_bounds = array<i64: 128, 128>}, {transform_indices = @transform_3, window_bounds = array<i64: 8, 128>}]} {
    %c0 = arith.constant 0 : index
    %c0_0 = arith.constant 0 : index
    %0 = vector.load %arg1[%c0, %c0_0] : memref<8x784xf32, #tpu.memory_space<vmem>>, vector<8x784xf32>
    %1 = arith.truncf %0 : vector<8x784xf32> to vector<8x784xbf16>
    %c0_1 = arith.constant 0 : index
    %c0_2 = arith.constant 0 : index
    %2 = vector.load %arg2[%c0_1, %c0_2] : memref<784x128xbf16, #tpu.memory_space<vmem>>, vector<784x128xbf16>
    %cst = arith.constant dense<0.000000e+00> : vector<8x128xf32>
    %3 = tpu.matmul %1, %2, %cst {dimension_numbers = #tpu.dot_dimension_numbers<[1], [0], [0], [1], [0, 0, 1, 1], [], []>} : vector<8x784xbf16>, vector<784x128xbf16>, vector<8x128xf32> -> vector<8x128xf32>
    %cst_3 = arith.constant 0.000000e+00 : f32
    %4 = vector.broadcast %cst_3 : f32 to vector<8x128xf32>
    %5 = arith.maximumf %3, %4 : vector<8x128xf32>
    %6 = arith.truncf %5 : vector<8x128xf32> to vector<8x128xbf16>
    %c0_4 = arith.constant 0 : index
    %c0_5 = arith.constant 0 : index
    %7 = vector.load %arg3[%c0_4, %c0_5] : memref<128x128xbf16, #tpu.memory_space<vmem>>, vector<128x128xbf16>
    %cst_6 = arith.constant dense<0.000000e+00> : vector<8x128xf32>
    %8 = tpu.matmul %6, %7, %cst_6 {dimension_numbers = #tpu.dot_dimension_numbers<[1], [0], [0], [1], [0, 0, 1, 1], [], []>} : vector<8x128xbf16>, vector<128x128xbf16>, vector<8x128xf32> -> vector<8x128xf32>
    %9 = arith.truncf %8 : vector<8x128xf32> to vector<8x128xbf16>
    %c0_7 = arith.constant 0 : index
    %c0_8 = arith.constant 0 : index
    %10 = vector.load %arg4[%c0_7, %c0_8] : memref<8x128xbf16, #tpu.memory_space<vmem>>, vector<8x128xbf16>
    tpu.vector_store %arg4[%c0_7, %c0_8], %9 {strides = array<i32>} : memref<8x128xbf16, #tpu.memory_space<vmem>>, vector<8x128xbf16>,
    return
  }
  func.func @transform_0(%arg0: i32) -> (i32, i32) {
    %c0_i32 = arith.constant 0 : i32
    %c0_i32_0 = arith.constant 0 : i32
    return %arg0, %c0_i32 : i32, i32
  }
  func.func @transform_1(%arg0: i32) -> (i32, i32) {
    %c0_i32 = arith.constant 0 : i32
    %c0_i32_0 = arith.constant 0 : i32
    %c0_i32_1 = arith.constant 0 : i32
    return %c0_i32, %c0_i32_0 : i32, i32
  }
  func.func @transform_2(%arg0: i32) -> (i32, i32) {
    %c0_i32 = arith.constant 0 : i32
    %c0_i32_0 = arith.constant 0 : i32
    %c0_i32_1 = arith.constant 0 : i32
    return %c0_i32, %c0_i32_0 : i32, i32
  }
  func.func @transform_3(%arg0: i32) -> (i32, i32) {
    %c0_i32 = arith.constant 0 : i32
    %c0_i32_0 = arith.constant 0 : i32
    return %arg0, %c0_i32 : i32, i32
  }
}

</mosaic_0001>

<llo_original>
// kernel: small_fnn_forward.1
$region0: #{small_fnn_forward.1}
  #allocation0 [shape = 'u32[]', space=smem, size = 0x4, offset = 0x4, fixed_abs, tag = 'smem constant byte address 0x4 - core index']
  #allocation1 [shape = 'u32[144,128]{1,0:T(1,128)}', space=vmem, size = 0x12000, scoped, tag = 'internal scratch']
  %s0 = inlined_call_operand.vmem [shape: f32[2,784], index: 0, kind: input, shape index: {}]
  %s1 = inlined_call_operand.hbm [shape: bf16[784,128], index: 1, kind: input, shape index: {}]
  %s2 = inlined_call_operand.vmem [shape: bf16[128,128], index: 2, kind: input, shape index: {}]
  %s3 = inlined_call_operand.vmem [shape: bf16[8,128], index: 3, kind: output, shape index: {}]
  %s4 = sld [smem:[#allocation0]]
  $region26: #{small_fnn_forward.1} parent=0
    _
  %s6 = ssub.s32 1, %s4
  %s7 = scalar_select 0, %s6, %s4
  $region1: #{small_fnn_forward.1} parent=0
    #allocation2 [shape = 'u8[200704]{0}', space=vmem, size = 0x31000, scoped, tag = 'input window, operand 1, single buffered']
    #allocation3 [shape = 's32[1]{0}', space=sflag, size = 0x4, scoped, tag = 'scoped memory for small_fnn_forward.1']
    %8 = vsyncpa [#allocation3], 0
    // Predicated region
    $region2: #{small_fnn_forward.1} parent=1 // pred_check
      _
    $region3: #{small_fnn_forward.1} parent=1 // pred_check_branch
      %10 = sbr.rel (0) target = $region5
    $region4: #{small_fnn_forward.1} parent=1 // pred_region
      _
    $region5: #{small_fnn_forward.1} parent=1 // pred_fallthru
      _
    // Predicated region
    $region6: #{small_fnn_forward.1} parent=1 // pred_check
      _
    $region7: #{small_fnn_forward.1} parent=1 // pred_check_branch
      %12 = sbr.rel (0) target = $region9
    $region8: #{small_fnn_forward.1} parent=1 // pred_region
      %s14 = ssub.s32 6272, 6272
      %15 = vsyncadd [#allocation3], %s14
      %s16 = sshll.u32 [#allocation2], 4
      %s17 = int_to_ptr.vmem [resolvable:$true] %s16
      %22 = dma.hbm_to_vmem [thread:$0]  %s1, 6272, %s17, [#allocation3], 64, 64, 4
    $region9: #{small_fnn_forward.1} parent=1 // pred_fallthru
      _
    // Predicated region
    $region10: #{small_fnn_forward.1} parent=1 // pred_check
      _
    $region11: #{small_fnn_forward.1} parent=1 // pred_check_branch
      %24 = sbr.rel (0) target = $region13
    $region12: #{small_fnn_forward.1} parent=1 // pred_region
      _
    $region13: #{small_fnn_forward.1} parent=1 // pred_fallthru
      _
    // Predicated region
    $region14: #{small_fnn_forward.1} parent=1 // pred_check
      _
    $region15: #{small_fnn_forward.1} parent=1 // pred_check_branch
      %26 = sbr.rel (0) target = $region17
    $region16: #{small_fnn_forward.1} parent=1 // pred_region
      %27 = dma.done [#allocation3], 6272
    $region17: #{small_fnn_forward.1} parent=1 // pred_fallthru
      _
    %v29 = vld [vmem:[%s0] sm:$0xff]
    %v30 = vld [vmem:[%s0 + $0x8] sm:$0x3f]
    %v31 = vld [vmem:[%s0 + $0xe] sm:$0xff]
    %v32 = vld [vmem:[%s0 + $0x16] sm:$0x3f]
    %v33 = vld [vmem:[%s0 + $0x1c] sm:$0xff]
    %v34 = vld [vmem:[%s0 + $0x24] sm:$0x3f]
    %v35 = vld [vmem:[%s0 + $0x2a] sm:$0xff]
    %v36 = vld [vmem:[%s0 + $0x32] sm:$0x3f]
    %v45 = vcombine.low %v29, %v31
    %v46 = vcombine.high %v29, %v31
    %v47 = vcombine.low %v33, %v35
    %v48 = vcombine.high %v33, %v35
    %v50 = vunpack.c.l.s4 1983009808
    %v51 = vunpack.c.0.s8 %v50
    %v52 = vlaneseq
    %v53 = vshrl.u32 %v52, 7
    %v54 = vsub.s32 %v51, %v53
    %v55 = vrot.slane %v45, %v54
    %v57 = vunpack.c.l.s4 1983009808
    %v58 = vunpack.c.0.s8 %v57
    %v59 = vlaneseq
    %v60 = vshrl.u32 %v59, 7
    %v61 = vsub.s32 %v58, %v60
    %v62 = vrot.slane %v46, %v61
    %v64 = vunpack.c.l.s4 1983009808
    %v65 = vunpack.c.0.s8 %v64
    %v66 = vlaneseq
    %v67 = vshrl.u32 %v66, 7
    %v68 = vsub.s32 %v65, %v67
    %v69 = vrot.slane %v47, %v68
    %v71 = vunpack.c.l.s4 1983009808
    %v72 = vunpack.c.0.s8 %v71
    %v73 = vlaneseq
    %v74 = vshrl.u32 %v73, 7
    %v75 = vsub.s32 %v72, %v74
    %v76 = vrot.slane %v48, %v75
    %v77 = vcombine.low %v55, %v69
    %v78 = vcombine.high %v55, %v69
    %v79 = vcombine.low %v62, %v76
    %v80 = vcombine.high %v62, %v76
    %v81 = vcombine.low %v30, %v32
    %v82 = vcombine.high %v30, %v32
    %v83 = vcombine.low %v34, %v36
    %v84 = vcombine.high %v34, %v36
    %v86 = vunpack.c.l.s4 1983009808
    %v87 = vunpack.c.0.s8 %v86
    %v88 = vlaneseq
    %v89 = vshrl.u32 %v88, 7
    %v90 = vsub.s32 %v87, %v89
    %v91 = vrot.slane %v81, %v90
    %v93 = vunpack.c.l.s4 1983009808
    %v94 = vunpack.c.0.s8 %v93
    %v95 = vlaneseq
    %v96 = vshrl.u32 %v95, 7
    %v97 = vsub.s32 %v94, %v96
    %v98 = vrot.slane %v82, %v97
    %v100 = vunpack.c.l.s4 1983009808
    %v101 = vunpack.c.0.s8 %v100
    %v102 = vlaneseq
    %v103 = vshrl.u32 %v102, 7
    %v104 = vsub.s32 %v101, %v103
    %v105 = vrot.slane %v83, %v104
    %v107 = vunpack.c.l.s4 1983009808
    %v108 = vunpack.c.0.s8 %v107
    %v109 = vlaneseq
    %v110 = vshrl.u32 %v109, 7
    %v111 = vsub.s32 %v108, %v110
    %v112 = vrot.slane %v84, %v111
    %v113 = vcombine.low %v91, %v105
    %v114 = vcombine.high %v91, %v105
    %v115 = vcombine.low %v98, %v112
    %v123 = vpack.c.bf16 %v77, %v77
    %v124 = vpack.c.bf16 %v78, %v78
    %v125 = vpack.c.bf16 %v79, %v79
    %v126 = vpack.c.bf16 %v80, %v80
    %v127 = vpack.c.bf16 %v113, %v113
    %v128 = vpack.c.bf16 %v114, %v114
    %v129 = vpack.c.bf16 %v115, %v115
    %v130 = vld [vmem:[#allocation2] sm:$0xf]
    %v131 = vld [vmem:[#allocation2 + $0x4] sm:$0xf]
    %v132 = vld [vmem:[#allocation2 + $0x8] sm:$0xf]
    %v133 = vld [vmem:[#allocation2 + $0xc] sm:$0xf]
    %v134 = vld [vmem:[#allocation2 + $0x10] sm:$0xf]
    %v135 = vld [vmem:[#allocation2 + $0x14] sm:$0xf]
    %v136 = vld [vmem:[#allocation2 + $0x18] sm:$0xf]
    %v137 = vld [vmem:[#allocation2 + $0x1c] sm:$0xf]
    %v138 = vld [vmem:[#allocation2 + $0x20] sm:$0xf]
    %v139 = vld [vmem:[#allocation2 + $0x24] sm:$0xf]
    %v140 = vld [vmem:[#allocation2 + $0x28] sm:$0xf]
    %v141 = vld [vmem:[#allocation2 + $0x2c] sm:$0xf]
    %v142 = vld [vmem:[#allocation2 + $0x30] sm:$0xf]
    %v143 = vld [vmem:[#allocation2 + $0x34] sm:$0xf]
    %v144 = vld [vmem:[#allocation2 + $0x38] sm:$0xf]
    %v145 = vld [vmem:[#allocation2 + $0x3c] sm:$0xf]
    %v146 = vld [vmem:[#allocation2 + $0x40] sm:$0xf]
    %v147 = vld [vmem:[#allocation2 + $0x44] sm:$0xf]
    %v148 = vld [vmem:[#allocation2 + $0x48] sm:$0xf]
    %v149 = vld [vmem:[#allocation2 + $0x4c] sm:$0xf]
    %v150 = vld [vmem:[#allocation2 + $0x50] sm:$0xf]
    %v151 = vld [vmem:[#allocation2 + $0x54] sm:$0xf]
    %v152 = vld [vmem:[#allocation2 + $0x58] sm:$0xf]
    %v153 = vld [vmem:[#allocation2 + $0x5c] sm:$0xf]
    %v154 = vld [vmem:[#allocation2 + $0x60] sm:$0xf]
    %v155 = vld [vmem:[#allocation2 + $0x64] sm:$0xf]
    %v156 = vld [vmem:[#allocation2 + $0x68] sm:$0xf]
    %v157 = vld [vmem:[#allocation2 + $0x6c] sm:$0xf]
    %v158 = vld [vmem:[#allocation2 + $0x70] sm:$0xf]
    %v159 = vld [vmem:[#allocation2 + $0x74] sm:$0xf]
    %v160 = vld [vmem:[#allocation2 + $0x78] sm:$0xf]
    %v161 = vld [vmem:[#allocation2 + $0x7c] sm:$0xf]
    %v162 = vld [vmem:[#allocation2 + $0x80] sm:$0xf]
    %v163 = vld [vmem:[#allocation2 + $0x84] sm:$0xf]
    %v164 = vld [vmem:[#allocation2 + $0x88] sm:$0xf]
    %v165 = vld [vmem:[#allocation2 + $0x8c] sm:$0xf]
    %v166 = vld [vmem:[#allocation2 + $0x90] sm:$0xf]
    %v167 = vld [vmem:[#allocation2 + $0x94] sm:$0xf]
    %v168 = vld [vmem:[#allocation2 + $0x98] sm:$0xf]
    %v169 = vld [vmem:[#allocation2 + $0x9c] sm:$0xf]
    %v170 = vld [vmem:[#allocation2 + $0xa0] sm:$0xf]
    %v171 = vld [vmem:[#allocation2 + $0xa4] sm:$0xf]
    %v172 = vld [vmem:[#allocation2 + $0xa8] sm:$0xf]
    %v173 = vld [vmem:[#allocation2 + $0xac] sm:$0xf]
    %v174 = vld [vmem:[#allocation2 + $0xb0] sm:$0xf]
    %v175 = vld [vmem:[#allocation2 + $0xb4] sm:$0xf]
    %v176 = vld [vmem:[#allocation2 + $0xb8] sm:$0xf]
    %v177 = vld [vmem:[#allocation2 + $0xbc] sm:$0xf]
    %v178 = vld [vmem:[#allocation2 + $0xc0] sm:$0xf]
    %v179 = vld [vmem:[#allocation2 + $0xc4] sm:$0xf]
    %v180 = vld [vmem:[#allocation2 + $0xc8] sm:$0xf]
    %v181 = vld [vmem:[#allocation2 + $0xcc] sm:$0xf]
    %v182 = vld [vmem:[#allocation2 + $0xd0] sm:$0xf]
    %v183 = vld [vmem:[#allocation2 + $0xd4] sm:$0xf]
    %v184 = vld [vmem:[#allocation2 + $0xd8] sm:$0xf]
    %v185 = vld [vmem:[#allocation2 + $0xdc] sm:$0xf]
    %v186 = vld [vmem:[#allocation2 + $0xe0] sm:$0xf]
    %v187 = vld [vmem:[#allocation2 + $0xe4] sm:$0xf]
    %v188 = vld [vmem:[#allocation2 + $0xe8] sm:$0xf]
    %v189 = vld [vmem:[#allocation2 + $0xec] sm:$0xf]
    %v190 = vld [vmem:[#allocation2 + $0xf0] sm:$0xf]
    %v191 = vld [vmem:[#allocation2 + $0xf4] sm:$0xf]
    %v192 = vld [vmem:[#allocation2 + $0xf8] sm:$0xf]
    %v193 = vld [vmem:[#allocation2 + $0xfc] sm:$0xf]
    %v194 = vld [vmem:[#allocation2 + $0x100] sm:$0xf]
    %v195 = vld [vmem:[#allocation2 + $0x104] sm:$0xf]
    %v196 = vld [vmem:[#allocation2 + $0x108] sm:$0xf]
    %v197 = vld [vmem:[#allocation2 + $0x10c] sm:$0xf]
    %v198 = vld [vmem:[#allocation2 + $0x110] sm:$0xf]
    %v199 = vld [vmem:[#allocation2 + $0x114] sm:$0xf]
    %v200 = vld [vmem:[#allocation2 + $0x118] sm:$0xf]
    %v201 = vld [vmem:[#allocation2 + $0x11c] sm:$0xf]
    %v202 = vld [vmem:[#allocation2 + $0x120] sm:$0xf]
    %v203 = vld [vmem:[#allocation2 + $0x124] sm:$0xf]
    %v204 = vld [vmem:[#allocation2 + $0x128] sm:$0xf]
    %v205 = vld [vmem:[#allocation2 + $0x12c] sm:$0xf]
    %v206 = vld [vmem:[#allocation2 + $0x130] sm:$0xf]
    %v207 = vld [vmem:[#allocation2 + $0x134] sm:$0xf]
    %v208 = vld [vmem:[#allocation2 + $0x138] sm:$0xf]
    %v209 = vld [vmem:[#allocation2 + $0x13c] sm:$0xf]
    %v210 = vld [vmem:[#allocation2 + $0x140] sm:$0xf]
    %v211 = vld [vmem:[#allocation2 + $0x144] sm:$0xf]
    %v212 = vld [vmem:[#allocation2 + $0x148] sm:$0xf]
    %v213 = vld [vmem:[#allocation2 + $0x14c] sm:$0xf]
    %v214 = vld [vmem:[#allocation2 + $0x150] sm:$0xf]
    %v215 = vld [vmem:[#allocation2 + $0x154] sm:$0xf]
    %v216 = vld [vmem:[#allocation2 + $0x158] sm:$0xf]
    %v217 = vld [vmem:[#allocation2 + $0x15c] sm:$0xf]
    %v218 = vld [vmem:[#allocation2 + $0x160] sm:$0xf]
    %v219 = vld [vmem:[#allocation2 + $0x164] sm:$0xf]
    %v220 = vld [vmem:[#allocation2 + $0x168] sm:$0xf]
    %v221 = vld [vmem:[#allocation2 + $0x16c] sm:$0xf]
    %v222 = vld [vmem:[#allocation2 + $0x170] sm:$0xf]
    %v223 = vld [vmem:[#allocation2 + $0x174] sm:$0xf]
    %v224 = vld [vmem:[#allocation2 + $0x178] sm:$0xf]
    %v225 = vld [vmem:[#allocation2 + $0x17c] sm:$0xf]
    %v226 = vld [vmem:[#allocation2 + $0x180] sm:$0xf]
    %v227 = vld [vmem:[#allocation2 + $0x184] sm:$0xf]
    %v326 = vunpack.c.l.b16 %v130
    %v327 = vunpack.c.l.b16 %v131
    %v328 = vunpack.c.l.b16 %v132
    %v329 = vunpack.c.l.b16 %v133
    %v330 = vunpack.c.l.b16 %v134
    %v331 = vunpack.c.l.b16 %v135
    %v332 = vunpack.c.l.b16 %v136
    %v333 = vunpack.c.l.b16 %v137
    %v334 = vunpack.c.l.b16 %v138
    %v335 = vunpack.c.l.b16 %v139
    %v336 = vunpack.c.l.b16 %v140
    %v337 = vunpack.c.l.b16 %v141
    %v338 = vunpack.c.l.b16 %v142
    %v339 = vunpack.c.l.b16 %v143
    %v340 = vunpack.c.l.b16 %v144
    %v341 = vunpack.c.l.b16 %v145
    %v342 = vunpack.c.l.b16 %v146
    %v343 = vunpack.c.l.b16 %v147
    %v344 = vunpack.c.l.b16 %v148
    %v345 = vunpack.c.l.b16 %v149
    %v346 = vunpack.c.l.b16 %v150
    %v347 = vunpack.c.l.b16 %v151
    %v348 = vunpack.c.l.b16 %v152
    %v349 = vunpack.c.l.b16 %v153
    %v350 = vunpack.c.l.b16 %v154
    %v351 = vunpack.c.l.b16 %v155
    %v352 = vunpack.c.l.b16 %v156
    %v353 = vunpack.c.l.b16 %v157
    %v354 = vunpack.c.l.b16 %v158
    %v355 = vunpack.c.l.b16 %v159
    %v356 = vunpack.c.l.b16 %v160
    %v357 = vunpack.c.l.b16 %v161
    %v358 = vunpack.c.l.b16 %v162
    %v359 = vunpack.c.l.b16 %v163
    %v360 = vunpack.c.l.b16 %v164
    %v361 = vunpack.c.l.b16 %v165
    %v362 = vunpack.c.l.b16 %v166
    %v363 = vunpack.c.l.b16 %v167
    %v364 = vunpack.c.l.b16 %v168
    %v365 = vunpack.c.l.b16 %v169
    %v366 = vunpack.c.l.b16 %v170
    %v367 = vunpack.c.l.b16 %v171
    %v368 = vunpack.c.l.b16 %v172
    %v369 = vunpack.c.l.b16 %v173
    %v370 = vunpack.c.l.b16 %v174
    %v371 = vunpack.c.l.b16 %v175
    %v372 = vunpack.c.l.b16 %v176
    %v373 = vunpack.c.l.b16 %v177
    %v374 = vunpack.c.l.b16 %v178
    %v375 = vunpack.c.l.b16 %v179
    %v376 = vunpack.c.l.b16 %v180
    %v377 = vunpack.c.l.b16 %v181
    %v378 = vunpack.c.l.b16 %v182
    %v379 = vunpack.c.l.b16 %v183
    %v380 = vunpack.c.l.b16 %v184
    %v381 = vunpack.c.l.b16 %v185
    %v382 = vunpack.c.l.b16 %v186
    %v383 = vunpack.c.l.b16 %v187
    %v384 = vunpack.c.l.b16 %v188
    %v385 = vunpack.c.l.b16 %v189
    %v386 = vunpack.c.l.b16 %v190
    %v387 = vunpack.c.l.b16 %v191
    %v388 = vunpack.c.l.b16 %v192
    %v389 = vunpack.c.l.b16 %v193
    %v390 = vunpack.c.l.b16 %v194
    %v391 = vunpack.c.l.b16 %v195
    %v392 = vunpack.c.l.b16 %v196
    %v393 = vunpack.c.l.b16 %v197
    %v394 = vunpack.c.l.b16 %v198
    %v395 = vunpack.c.l.b16 %v199
    %v396 = vunpack.c.l.b16 %v200
    %v397 = vunpack.c.l.b16 %v201
    %v398 = vunpack.c.l.b16 %v202
    %v399 = vunpack.c.l.b16 %v203
    %v400 = vunpack.c.l.b16 %v204
    %v401 = vunpack.c.l.b16 %v205
    %v402 = vunpack.c.l.b16 %v206
    %v403 = vunpack.c.l.b16 %v207
    %v404 = vunpack.c.l.b16 %v208
    %v405 = vunpack.c.l.b16 %v209
    %v406 = vunpack.c.l.b16 %v210
    %v407 = vunpack.c.l.b16 %v211
    %v408 = vunpack.c.l.b16 %v212
    %v409 = vunpack.c.l.b16 %v213
    %v410 = vunpack.c.l.b16 %v214
    %v411 = vunpack.c.l.b16 %v215
    %v412 = vunpack.c.l.b16 %v216
    %v413 = vunpack.c.l.b16 %v217
    %v414 = vunpack.c.l.b16 %v218
    %v415 = vunpack.c.l.b16 %v219
    %v416 = vunpack.c.l.b16 %v220
    %v417 = vunpack.c.l.b16 %v221
    %v418 = vunpack.c.l.b16 %v222
    %v419 = vunpack.c.l.b16 %v223
    %v420 = vunpack.c.l.b16 %v224
    %v421 = vunpack.c.l.b16 %v225
    %v422 = vunpack.c.l.b16 %v226
    %v423 = vunpack.c.l.b16 %v227
    %v424 = vpack.c.b16 %v327, %v326
    %v425 = vpack.c.b16 %v329, %v328
    %v426 = vpack.c.b16 %v331, %v330
    %v427 = vpack.c.b16 %v333, %v332
    %v428 = vpack.c.b16 %v335, %v334
    %v429 = vpack.c.b16 %v337, %v336
    %v430 = vpack.c.b16 %v339, %v338
    %v431 = vpack.c.b16 %v341, %v340
    %v432 = vpack.c.b16 %v343, %v342
    %v433 = vpack.c.b16 %v345, %v344
    %v434 = vpack.c.b16 %v347, %v346
    %v435 = vpack.c.b16 %v349, %v348
    %v436 = vpack.c.b16 %v351, %v350
    %v437 = vpack.c.b16 %v353, %v352
    %v438 = vpack.c.b16 %v355, %v354
    %v439 = vpack.c.b16 %v357, %v356
    %v440 = vpack.c.b16 %v359, %v358
    %v441 = vpack.c.b16 %v361, %v360
    %v442 = vpack.c.b16 %v363, %v362
    %v443 = vpack.c.b16 %v365, %v364
    %v444 = vpack.c.b16 %v367, %v366
    %v445 = vpack.c.b16 %v369, %v368
    %v446 = vpack.c.b16 %v371, %v370
    %v447 = vpack.c.b16 %v373, %v372
    %v448 = vpack.c.b16 %v375, %v374
    %v449 = vpack.c.b16 %v377, %v376
    %v450 = vpack.c.b16 %v379, %v378
    %v451 = vpack.c.b16 %v381, %v380
    %v452 = vpack.c.b16 %v383, %v382
    %v453 = vpack.c.b16 %v385, %v384
    %v454 = vpack.c.b16 %v387, %v386
    %v455 = vpack.c.b16 %v389, %v388
    %v456 = vpack.c.b16 %v391, %v390
    %v457 = vpack.c.b16 %v393, %v392
    %v458 = vpack.c.b16 %v395, %v394
    %v459 = vpack.c.b16 %v397, %v396
    %v460 = vpack.c.b16 %v399, %v398
    %v461 = vpack.c.b16 %v401, %v400
    %v462 = vpack.c.b16 %v403, %v402
    %v463 = vpack.c.b16 %v405, %v404
    %v464 = vpack.c.b16 %v407, %v406
    %v465 = vpack.c.b16 %v409, %v408
    %v466 = vpack.c.b16 %v411, %v410
    %v467 = vpack.c.b16 %v413, %v412
    %v468 = vpack.c.b16 %v415, %v414
    %v469 = vpack.c.b16 %v417, %v416
    %v470 = vpack.c.b16 %v419, %v418
    %v471 = vpack.c.b16 %v421, %v420
    %v472 = vpack.c.b16 %v423, %v422
    %vm522 = vcmask 130048
    %v524 = vsel %vm522, %v129, 0
    %526 = vmatprep.subr.bf16.mxu0 0
    %527 = vmatpush1.bf16.msra.mxu0 %v424
    %528 = vmatprep.subr.bf16.mxu0 0
    %529 = vmatpush1.bf16.msra.mxu0 %v425
    %530 = vmatprep.subr.bf16.mxu0 0
    %531 = vmatpush1.bf16.msra.mxu0 %v426
    %532 = vmatprep.subr.bf16.mxu0 0
    %533 = vmatpush1.bf16.msra.mxu0 %v427
    %534 = vmatprep.subr.bf16.mxu0 0
    %535 = vmatpush1.bf16.msra.mxu0 %v428
    %536 = vmatprep.subr.bf16.mxu0 0
    %537 = vmatpush1.bf16.msra.mxu0 %v429
    %538 = vmatprep.subr.bf16.mxu0 0
    %539 = vmatpush1.bf16.msra.mxu0 %v430
    %540 = vmatprep.subr.bf16.mxu0 0
    %541 = vmatpush1.bf16.msra.mxu0 %v431
    %542 = vmatprep.subr.bf16.mxu0 0
    %543 = vmatpush1.bf16.msra.mxu0 %v432
    %544 = vmatprep.subr.bf16.mxu0 0
    %545 = vmatpush1.bf16.msra.mxu0 %v433
    %546 = vmatprep.subr.bf16.mxu0 0
    %547 = vmatpush1.bf16.msra.mxu0 %v434
    %548 = vmatprep.subr.bf16.mxu0 0
    %549 = vmatpush1.bf16.msra.mxu0 %v435
    %550 = vmatprep.subr.bf16.mxu0 0
    %551 = vmatpush1.bf16.msra.mxu0 %v436
    %552 = vmatprep.subr.bf16.mxu0 0
    %553 = vmatpush1.bf16.msra.mxu0 %v437
    %554 = vmatprep.subr.bf16.mxu0 0
    %555 = vmatpush1.bf16.msra.mxu0 %v438
    %556 = vmatprep.subr.bf16.mxu0 0
    %557 = vmatpush1.bf16.msra.mxu0 %v439
    %558 = vmatprep.mubr.bf16.mxu0 %v124
    %559 = vmatmul.mubr.bf16.gmra.mrb[0].mxu0 %v123
    %v560 = vpop.f32.mrb[0].mxu0
    %v561 = vadd.f32 0.0, %v560
    %v562 = vpop.f32.mrb[0].mxu0
    %v563 = vpop.f32.mrb[0].mxu0
    %v564 = vpop.f32.mrb[0].mxu0
    %565 = vdwg.mxu0
    %566 = vmatprep.subr.bf16.mxu0 0
    %567 = vmatpush1.bf16.msra.mxu0 %v440
    %568 = vmatprep.subr.bf16.mxu0 0
    %569 = vmatpush1.bf16.msra.mxu0 %v441
    %570 = vmatprep.subr.bf16.mxu0 0
    %571 = vmatpush1.bf16.msra.mxu0 %v442
    %572 = vmatprep.subr.bf16.mxu0 0
    %573 = vmatpush1.bf16.msra.mxu0 %v443
    %574 = vmatprep.subr.bf16.mxu0 0
    %575 = vmatpush1.bf16.msra.mxu0 %v444
    %576 = vmatprep.subr.bf16.mxu0 0
    %577 = vmatpush1.bf16.msra.mxu0 %v445
    %578 = vmatprep.subr.bf16.mxu0 0
    %579 = vmatpush1.bf16.msra.mxu0 %v446
    %580 = vmatprep.subr.bf16.mxu0 0
    %581 = vmatpush1.bf16.msra.mxu0 %v447
    %582 = vmatprep.subr.bf16.mxu0 0
    %583 = vmatpush1.bf16.msra.mxu0 %v448
    %584 = vmatprep.subr.bf16.mxu0 0
    %585 = vmatpush1.bf16.msra.mxu0 %v449
    %586 = vmatprep.subr.bf16.mxu0 0
    %587 = vmatpush1.bf16.msra.mxu0 %v450
    %588 = vmatprep.subr.bf16.mxu0 0
    %589 = vmatpush1.bf16.msra.mxu0 %v451
    %590 = vmatprep.subr.bf16.mxu0 0
    %591 = vmatpush1.bf16.msra.mxu0 %v452
    %592 = vmatprep.subr.bf16.mxu0 0
    %593 = vmatpush1.bf16.msra.mxu0 %v453
    %594 = vmatprep.subr.bf16.mxu0 0
    %595 = vmatpush1.bf16.msra.mxu0 %v454
    %596 = vmatprep.subr.bf16.mxu0 0
    %597 = vmatpush1.bf16.msra.mxu0 %v455
    %598 = vmatprep.mubr.bf16.mxu0 %v126
    %599 = vmatmul.mubr.bf16.gmra.mrb[0].mxu0 %v125
    %v600 = vpop.f32.mrb[0].mxu0
    %v601 = vadd.f32 %v561, %v600
    %v602 = vpop.f32.mrb[0].mxu0
    %v603 = vpop.f32.mrb[0].mxu0
    %v604 = vpop.f32.mrb[0].mxu0
    %605 = vdwg.mxu0
    %606 = vmatprep.subr.bf16.mxu0 0
    %607 = vmatpush1.bf16.msra.mxu0 %v456
    %608 = vmatprep.subr.bf16.mxu0 0
    %609 = vmatpush1.bf16.msra.mxu0 %v457
    %610 = vmatprep.subr.bf16.mxu0 0
    %611 = vmatpush1.bf16.msra.mxu0 %v458
    %612 = vmatprep.subr.bf16.mxu0 0
    %613 = vmatpush1.bf16.msra.mxu0 %v459
    %614 = vmatprep.subr.bf16.mxu0 0
    %615 = vmatpush1.bf16.msra.mxu0 %v460
    %616 = vmatprep.subr.bf16.mxu0 0
    %617 = vmatpush1.bf16.msra.mxu0 %v461
    %618 = vmatprep.subr.bf16.mxu0 0
    %619 = vmatpush1.bf16.msra.mxu0 %v462
    %620 = vmatprep.subr.bf16.mxu0 0
    %621 = vmatpush1.bf16.msra.mxu0 %v463
    %622 = vmatprep.subr.bf16.mxu0 0
    %623 = vmatpush1.bf16.msra.mxu0 %v464
    %624 = vmatprep.subr.bf16.mxu0 0
    %625 = vmatpush1.bf16.msra.mxu0 %v465
    %626 = vmatprep.subr.bf16.mxu0 0
    %627 = vmatpush1.bf16.msra.mxu0 %v466
    %628 = vmatprep.subr.bf16.mxu0 0
    %629 = vmatpush1.bf16.msra.mxu0 %v467
    %630 = vmatprep.subr.bf16.mxu0 0
    %631 = vmatpush1.bf16.msra.mxu0 %v468
    %632 = vmatprep.subr.bf16.mxu0 0
    %633 = vmatpush1.bf16.msra.mxu0 %v469
    %634 = vmatprep.subr.bf16.mxu0 0
    %635 = vmatpush1.bf16.msra.mxu0 %v470
    %636 = vmatprep.subr.bf16.mxu0 0
    %637 = vmatpush1.bf16.msra.mxu0 %v471
    %638 = vmatprep.mubr.bf16.mxu0 %v128
    %639 = vmatmul.mubr.bf16.gmra.mrb[0].mxu0 %v127
    %v640 = vpop.f32.mrb[0].mxu0
    %v641 = vadd.f32 %v601, %v640
    %v642 = vpop.f32.mrb[0].mxu0
    %v643 = vpop.f32.mrb[0].mxu0
    %v644 = vpop.f32.mrb[0].mxu0
    %645 = vdwg.mxu0
    %646 = vmatprep.subr.bf16.mxu0 0
    %647 = vmatpush1.bf16.msra.mxu0 %v472
    %648 = vmatprep.subr.bf16.mxu0 0
    %649 = vmatpush1.bf16.msra.mxu0 0
    %650 = vmatprep.subr.bf16.mxu0 0
    %651 = vmatpush1.bf16.msra.mxu0 0
    %652 = vmatprep.subr.bf16.mxu0 0
    %653 = vmatpush1.bf16.msra.mxu0 0
    %654 = vmatprep.subr.bf16.mxu0 0
    %655 = vmatpush1.bf16.msra.mxu0 0
    %656 = vmatprep.subr.bf16.mxu0 0
    %657 = vmatpush1.bf16.msra.mxu0 0
    %658 = vmatprep.subr.bf16.mxu0 0
    %659 = vmatpush1.bf16.msra.mxu0 0
    %660 = vmatprep.subr.bf16.mxu0 0
    %661 = vmatpush1.bf16.msra.mxu0 0
    %662 = vmatprep.subr.bf16.mxu0 0
    %663 = vmatpush1.bf16.msra.mxu0 0
    %664 = vmatprep.subr.bf16.mxu0 0
    %665 = vmatpush1.bf16.msra.mxu0 0
    %666 = vmatprep.subr.bf16.mxu0 0
    %667 = vmatpush1.bf16.msra.mxu0 0
    %668 = vmatprep.subr.bf16.mxu0 0
    %669 = vmatpush1.bf16.msra.mxu0 0
    %670 = vmatprep.subr.bf16.mxu0 0
    %671 = vmatpush1.bf16.msra.mxu0 0
    %672 = vmatprep.subr.bf16.mxu0 0
    %673 = vmatpush1.bf16.msra.mxu0 0
    %674 = vmatprep.subr.bf16.mxu0 0
    %675 = vmatpush1.bf16.msra.mxu0 0
    %676 = vmatprep.subr.bf16.mxu0 0
    %677 = vmatpush1.bf16.msra.mxu0 0
    %678 = vmatprep.mubr.bf16.mxu0 0
    %679 = vmatmul.mubr.bf16.gmra.mrb[0].mxu0 %v524
    %v680 = vpop.f32.mrb[0].mxu0
    %v681 = vadd.f32 %v641, %v680
    %v682 = vpop.f32.mrb[0].mxu0
    %v683 = vpop.f32.mrb[0].mxu0
    %v684 = vpop.f32.mrb[0].mxu0
    %685 = vdwg.mxu0
    %v686 = vmax.f32 %v681, 0.0
    %v687 = vpack.c.bf16 %v686, %v686
    %v688 = vld [vmem:[%s2] sm:$0xf]
    %v689 = vld [vmem:[%s2 + $0x4] sm:$0xf]
    %v690 = vld [vmem:[%s2 + $0x8] sm:$0xf]
    %v691 = vld [vmem:[%s2 + $0xc] sm:$0xf]
    %v692 = vld [vmem:[%s2 + $0x10] sm:$0xf]
    %v693 = vld [vmem:[%s2 + $0x14] sm:$0xf]
    %v694 = vld [vmem:[%s2 + $0x18] sm:$0xf]
    %v695 = vld [vmem:[%s2 + $0x1c] sm:$0xf]
    %v696 = vld [vmem:[%s2 + $0x20] sm:$0xf]
    %v697 = vld [vmem:[%s2 + $0x24] sm:$0xf]
    %v698 = vld [vmem:[%s2 + $0x28] sm:$0xf]
    %v699 = vld [vmem:[%s2 + $0x2c] sm:$0xf]
    %v700 = vld [vmem:[%s2 + $0x30] sm:$0xf]
    %v701 = vld [vmem:[%s2 + $0x34] sm:$0xf]
    %v702 = vld [vmem:[%s2 + $0x38] sm:$0xf]
    %v703 = vld [vmem:[%s2 + $0x3c] sm:$0xf]
    %v720 = vunpack.c.l.b16 %v688
    %v721 = vunpack.c.l.b16 %v689
    %v722 = vunpack.c.l.b16 %v690
    %v723 = vunpack.c.l.b16 %v691
    %v724 = vunpack.c.l.b16 %v692
    %v725 = vunpack.c.l.b16 %v693
    %v726 = vunpack.c.l.b16 %v694
    %v727 = vunpack.c.l.b16 %v695
    %v728 = vunpack.c.l.b16 %v696
    %v729 = vunpack.c.l.b16 %v697
    %v730 = vunpack.c.l.b16 %v698
    %v731 = vunpack.c.l.b16 %v699
    %v732 = vunpack.c.l.b16 %v700
    %v733 = vunpack.c.l.b16 %v701
    %v734 = vunpack.c.l.b16 %v702
    %v735 = vunpack.c.l.b16 %v703
    %v736 = vpack.c.b16 %v721, %v720
    %v737 = vpack.c.b16 %v723, %v722
    %v738 = vpack.c.b16 %v725, %v724
    %v739 = vpack.c.b16 %v727, %v726
    %v740 = vpack.c.b16 %v729, %v728
    %v741 = vpack.c.b16 %v731, %v730
    %v742 = vpack.c.b16 %v733, %v732
    %v743 = vpack.c.b16 %v735, %v734
    %752 = vmatprep.subr.bf16.mxu0 0
    %753 = vmatpush1.bf16.msra.mxu0 %v736
    %754 = vmatprep.subr.bf16.mxu0 0
    %755 = vmatpush1.bf16.msra.mxu0 %v737
    %756 = vmatprep.subr.bf16.mxu0 0
    %757 = vmatpush1.bf16.msra.mxu0 %v738
    %758 = vmatprep.subr.bf16.mxu0 0
    %759 = vmatpush1.bf16.msra.mxu0 %v739
    %760 = vmatprep.subr.bf16.mxu0 0
    %761 = vmatpush1.bf16.msra.mxu0 %v740
    %762 = vmatprep.subr.bf16.mxu0 0
    %763 = vmatpush1.bf16.msra.mxu0 %v741
    %764 = vmatprep.subr.bf16.mxu0 0
    %765 = vmatpush1.bf16.msra.mxu0 %v742
    %766 = vmatprep.subr.bf16.mxu0 0
    %767 = vmatpush1.bf16.msra.mxu0 %v743
    %768 = vmatprep.subr.bf16.mxu0 0
    %769 = vmatpush1.bf16.msra.mxu0 0
    %770 = vmatprep.subr.bf16.mxu0 0
    %771 = vmatpush1.bf16.msra.mxu0 0
    %772 = vmatprep.subr.bf16.mxu0 0
    %773 = vmatpush1.bf16.msra.mxu0 0
    %774 = vmatprep.subr.bf16.mxu0 0
    %775 = vmatpush1.bf16.msra.mxu0 0
    %776 = vmatprep.subr.bf16.mxu0 0
    %777 = vmatpush1.bf16.msra.mxu0 0
    %778 = vmatprep.subr.bf16.mxu0 0
    %779 = vmatpush1.bf16.msra.mxu0 0
    %780 = vmatprep.subr.bf16.mxu0 0
    %781 = vmatpush1.bf16.msra.mxu0 0
    %782 = vmatprep.subr.bf16.mxu0 0
    %783 = vmatpush1.bf16.msra.mxu0 0
    %784 = vmatprep.mubr.bf16.mxu0 0
    %785 = vmatmul.mubr.bf16.gmra.mrb[0].mxu0 %v687
    %v786 = vpop.f32.mrb[0].mxu0
    %v787 = vadd.f32 0.0, %v786
    %v788 = vpop.f32.mrb[0].mxu0
    %v789 = vpop.f32.mrb[0].mxu0
    %v790 = vpop.f32.mrb[0].mxu0
    %791 = vdwg.mxu0
    %v792 = vpack.c.bf16 %v787, %v787
    %793 = vst [vmem:[%s3] sm:$0xf] %v792
    // Predicated region
    $region18: #{small_fnn_forward.1} parent=1 // pred_check
      _
    $region19: #{small_fnn_forward.1} parent=1 // pred_check_branch
      %795 = sbr.rel (0) target = $region21
    $region20: #{small_fnn_forward.1} parent=1 // pred_region
      _
    $region21: #{small_fnn_forward.1} parent=1 // pred_fallthru
      _
    // Predicated region
    $region22: #{small_fnn_forward.1} parent=1 // pred_check
      _
    $region23: #{small_fnn_forward.1} parent=1 // pred_check_branch
      %797 = sbr.rel (0) target = $region25
    $region24: #{small_fnn_forward.1} parent=1 // pred_region
      _
    $region25: #{small_fnn_forward.1} parent=1 // pred_fallthru
      _
    %798 = vsyncpa [#allocation3], 1

</llo_original>
